<compile_context>
chip_gen: v6e
topology: v6e:2x2x1
jax: 0.10.0
libtpu: 0.0.40
codegen_flags: <defaults>
</compile_context>

<pallas_src>
import jax
import jax.numpy as jnp
from jax.experimental import pallas as pl
from jax.experimental.pallas import tpu as pltpu

HIDDEN = 64    # matches SimpleRNN default hidden_size=64
GATE = 128     # lane-aligned gate stride (hidden zero-padded to one full lane group)
SEQ = 8        # small sequence length for the example input


def gru_kernel(x_ref, w_ih_ref, b_cat_ref, w_hh_ref, bhn_ref, wout_ref, bout_ref,
               out_ref):
    T = x_ref.shape[0]
    G = bhn_ref.shape[1]                     # 128: lane-aligned gate stride

    # ---- hoisted work: off the serial h -> h dependency chain ----------------
    # Input-gate contributions for every timestep at once (pure VPU work):
    #   gi[t, :] = x[t] * [W_ir | W_iz | W_in] + [b_ir+b_hr | b_iz+b_hz | b_in]
    gi = x_ref[...] * w_ih_ref[...] + b_cat_ref[...]        # (T,1)*(1,3G)+(1,3G) -> (T,3G)

    # Recurrent weights loaded & cast to bf16 once (single-pass MXU per step).
    w_hh = w_hh_ref[...].astype(jnp.bfloat16)               # (G, 3G)  [Whr^T|Whz^T|Whn^T], zero-padded
    b_hn = bhn_ref[...]                                      # (1, G)   NOT folded (lives inside r * (...))

    # ---- t = 0 peeled: h == 0  =>  gh == 0, skip the first matmul -------------
    gi0 = gi[0:1, :]
    r = jax.nn.sigmoid(gi0[:, 0:G])
    z = jax.nn.sigmoid(gi0[:, G:2 * G])
    n = jnp.tanh(gi0[:, 2 * G:3 * G] + r * b_hn)
    h = (1.0 - z) * n                                        # (1, G) f32; pad lanes stay exactly 0

    # ---- serial recurrence, t = 1 .. T-1 (T static & small -> full unroll) ----
    # TODO(synk): for large T switch to lax.fori_loop(..., unroll=4/8) and hold
    # w_hh resident in the MXU via pltpu.matmul_push_rhs/acc_lhs/pop.
    for t in range(1, T):
        gi_t = gi[t:t + 1, :]                                # (1, 3G), static slice
        gh = jnp.dot(h.astype(jnp.bfloat16), w_hh,
                     preferred_element_type=jnp.float32)     # (1, 3G), one MXU issue / step
        r = jax.nn.sigmoid(gi_t[:, 0:G] + gh[:, 0:G])
        z = jax.nn.sigmoid(gi_t[:, G:2 * G] + gh[:, G:2 * G])
        n = jnp.tanh(gi_t[:, 2 * G:3 * G] + r * (gh[:, 2 * G:3 * G] + b_hn))
        h = (1.0 - z) * n + z * h

    # Output Linear(H, 1): VPU multiply + lane reduce (no extra MXU round trip).
    out_ref[...] = jnp.sum(h * wout_ref[...], axis=-1, keepdims=True) + bout_ref[...]


def init_params(key, hidden=HIDDEN):
    """PyTorch-layout GRU + Linear params, U(-1/sqrt(H), 1/sqrt(H)) init."""
    k = 1.0 / float(hidden) ** 0.5
    keys = jax.random.split(key, 6)
    w_ih = jax.random.uniform(keys[0], (3 * hidden, 1), jnp.float32, -k, k)
    w_hh = jax.random.uniform(keys[1], (3 * hidden, hidden), jnp.float32, -k, k)
    b_ih = jax.random.uniform(keys[2], (3 * hidden,), jnp.float32, -k, k)
    b_hh = jax.random.uniform(keys[3], (3 * hidden,), jnp.float32, -k, k)
    w_out = jax.random.uniform(keys[4], (1, hidden), jnp.float32, -k, k)
    b_out = jax.random.uniform(keys[5], (1,), jnp.float32, -k, k)
    return (w_ih, w_hh, b_ih, b_hh, w_out, b_out)


def prep_kernel_params(tparams, hidden=HIDDEN, gate=GATE):
    """Host-side fusion of the PyTorch params into the lane-aligned kernel layout."""
    w_ih, w_hh, b_ih, b_hh, w_out, b_out = tparams
    H, G = hidden, gate

    def pad_lane(v):                                   # (H,) -> (G,), explicit zero fill
        return jnp.pad(v, (0, G - H))

    def pad_block(wg):                                 # (H,H) gate block -> (G,G), wg^T top-left
        return jnp.pad(wg.T, ((0, G - H), (0, G - H)))

    # input weights: input_size == 1, so each gate weight is a length-H column.
    w_ih_cat = jnp.concatenate(
        [pad_lane(w_ih[g * H:(g + 1) * H, 0]) for g in range(3)]).reshape(1, 3 * G)
    # fold r/z biases; n-gate input bias stays un-folded with b_hn separate.
    b_cat = jnp.concatenate([pad_lane(b_ih[0:H] + b_hh[0:H]),
                             pad_lane(b_ih[H:2 * H] + b_hh[H:2 * H]),
                             pad_lane(b_ih[2 * H:3 * H])]).reshape(1, 3 * G)
    # fused recurrent weight, pre-transposed so the step does h @ W, lane-aligned blocks.
    w_hh_cat = jnp.concatenate(
        [pad_block(w_hh[g * H:(g + 1) * H]) for g in range(3)], axis=1)   # (G, 3G)
    bhn = pad_lane(b_hh[2 * H:3 * H]).reshape(1, G)
    wout_row = pad_lane(w_out[0]).reshape(1, G)
    bout = b_out.reshape(1, 1)
    return (w_ih_cat, b_cat, w_hh_cat, bhn, wout_row, bout)


def simple_rnn_forward(x, kparams):
    (w_ih_cat, b_cat, w_hh_cat, bhn, wout_row, bout) = kparams
    if x.size == 0:
        # PyTorch path: h = zeros(1, H) -> output is just the Linear bias (scalar)
        return bout[0, 0]

    T = x.shape[0]
    x2 = x.reshape(T, 1).astype(jnp.float32)
    vmem = pl.BlockSpec(memory_space=pltpu.MemorySpace.VMEM)

    out = pl.pallas_call(
        gru_kernel,
        out_shape=jax.ShapeDtypeStruct((1, 1), jnp.float32),
        in_specs=[vmem] * 7,            # exactly one spec per input
        out_specs=vmem,
    )(x2, w_ih_cat, b_cat, w_hh_cat, bhn, wout_row, bout)
    return out[0, 0]                    # matches .squeeze() -> scalar


def simple_rnn_reference(x, tparams):
    """Pure-JAX f32 reference of PyTorch GRU(1,H) + Linear(H,1) for correctness."""
    w_ih, w_hh, b_ih, b_hh, w_out, b_out = tparams
    H = w_hh.shape[1]
    Wir, Wiz, Win = w_ih[0:H], w_ih[H:2 * H], w_ih[2 * H:3 * H]
    Whr, Whz, Whn = w_hh[0:H], w_hh[H:2 * H], w_hh[2 * H:3 * H]
    bir, biz, bin_ = b_ih[0:H], b_ih[H:2 * H], b_ih[2 * H:3 * H]
    bhr, bhz, bhn = b_hh[0:H], b_hh[H:2 * H], b_hh[2 * H:3 * H]
    h = jnp.zeros((1, H), jnp.float32)
    for t in range(x.shape[0]):
        xt = x[t].reshape(1, 1)
        r = jax.nn.sigmoid(xt @ Wir.T + bir + h @ Whr.T + bhr)
        z = jax.nn.sigmoid(xt @ Wiz.T + biz + h @ Whz.T + bhz)
        n = jnp.tanh(xt @ Win.T + bin_ + r * (h @ Whn.T + bhn))
        h = (1.0 - z) * n + z * h
    return (h @ w_out.T + b_out)[0, 0]


if __name__ == "__main__":
    key = jax.random.PRNGKey(0)
    k_param, k_x = jax.random.split(key)
    tparams = init_params(k_param, HIDDEN)
    kparams = prep_kernel_params(tparams, HIDDEN, GATE)
    x = jax.random.normal(k_x, (SEQ,), dtype=jnp.float32)

    y = simple_rnn_forward(x, kparams)
    y = jax.block_until_ready(y)

    y_ref = simple_rnn_reference(x, tparams)
    assert y.shape == ()  # scalar, like torch .squeeze()
    # bf16 MXU operands in the recurrence -> relaxed tolerance vs the f32 reference.
    assert jnp.allclose(y, y_ref, atol=2e-2, rtol=2e-2), (y, y_ref)
    print("KERNEL_OK")
</pallas_src>

<mosaic_0001>
module attributes {stable_mosaic.version = 11 : i64} {
  func.func @gru_kernel(%arg0: memref<8x1xf32, #tpu.memory_space<vmem>>, %arg1: memref<1x384xf32, #tpu.memory_space<vmem>>, %arg2: memref<1x384xf32, #tpu.memory_space<vmem>>, %arg3: memref<128x384xf32, #tpu.memory_space<vmem>>, %arg4: memref<1x128xf32, #tpu.memory_space<vmem>>, %arg5: memref<1x128xf32, #tpu.memory_space<vmem>>, %arg6: memref<1x1xf32, #tpu.memory_space<vmem>>, %arg7: memref<1x1xf32, #tpu.memory_space<vmem>>) attributes {dimension_semantics = [], scalar_prefetch = 0 : i64, scratch_operands = 0 : i64, tpu.core_type = #tpu.core_type<tc>} {
    %c0 = arith.constant 0 : index
    %c0_0 = arith.constant 0 : index
    %0 = vector.load %arg0[%c0, %c0_0] : memref<8x1xf32, #tpu.memory_space<vmem>>, vector<8x1xf32>
    %c0_1 = arith.constant 0 : index
    %c0_2 = arith.constant 0 : index
    %1 = vector.load %arg1[%c0_1, %c0_2] : memref<1x384xf32, #tpu.memory_space<vmem>>, vector<1x384xf32>
    %2 = vector.broadcast %0 : vector<8x1xf32> to vector<8x384xf32>
    %3 = vector.broadcast %1 : vector<1x384xf32> to vector<8x384xf32>
    %4 = arith.mulf %2, %3 : vector<8x384xf32>
    %c0_3 = arith.constant 0 : index
    %c0_4 = arith.constant 0 : index
    %5 = vector.load %arg2[%c0_3, %c0_4] : memref<1x384xf32, #tpu.memory_space<vmem>>, vector<1x384xf32>
    %6 = vector.broadcast %5 : vector<1x384xf32> to vector<8x384xf32>
    %7 = arith.addf %4, %6 : vector<8x384xf32>
    %c0_5 = arith.constant 0 : index
    %c0_6 = arith.constant 0 : index
    %8 = vector.load %arg3[%c0_5, %c0_6] : memref<128x384xf32, #tpu.memory_space<vmem>>, vector<128x384xf32>
    %9 = arith.truncf %8 : vector<128x384xf32> to vector<128x384xbf16>
    %c0_7 = arith.constant 0 : index
    %c0_8 = arith.constant 0 : index
    %10 = vector.load %arg4[%c0_7, %c0_8] : memref<1x128xf32, #tpu.memory_space<vmem>>, vector<1x128xf32>
    %11 = vector.extract_strided_slice %7 {offsets = [0, 0], sizes = [1, 384], strides = [1, 1]} : vector<8x384xf32> to vector<1x384xf32>
    %12 = vector.extract_strided_slice %11 {offsets = [0, 0], sizes = [1, 128], strides = [1, 1]} : vector<1x384xf32> to vector<1x128xf32>
    %13 = arith.negf %12 : vector<1x128xf32>
    %14 = math.exp %13 : vector<1x128xf32>
    %cst = arith.constant 1.000000e+00 : f32
    %15 = vector.broadcast %cst : f32 to vector<1x128xf32>
    %16 = arith.addf %15, %14 : vector<1x128xf32>
    %17 = arith.divf %15, %16 : vector<1x128xf32>
    %18 = vector.extract_strided_slice %11 {offsets = [0, 128], sizes = [1, 128], strides = [1, 1]} : vector<1x384xf32> to vector<1x128xf32>
    %19 = arith.negf %18 : vector<1x128xf32>
    %20 = math.exp %19 : vector<1x128xf32>
    %cst_9 = arith.constant 1.000000e+00 : f32
    %21 = vector.broadcast %cst_9 : f32 to vector<1x128xf32>
    %22 = arith.addf %21, %20 : vector<1x128xf32>
    %23 = arith.divf %21, %22 : vector<1x128xf32>
    %24 = vector.extract_strided_slice %11 {offsets = [0, 256], sizes = [1, 128], strides = [1, 1]} : vector<1x384xf32> to vector<1x128xf32>
    %25 = arith.mulf %17, %10 : vector<1x128xf32>
    %26 = arith.addf %24, %25 : vector<1x128xf32>
    %27 = math.tanh %26 : vector<1x128xf32>
    %cst_10 = arith.constant 1.000000e+00 : f32
    %28 = vector.broadcast %cst_10 : f32 to vector<1x128xf32>
    %29 = arith.subf %28, %23 : vector<1x128xf32>
    %30 = arith.mulf %29, %27 : vector<1x128xf32>
    %31 = vector.extract_strided_slice %7 {offsets = [1, 0], sizes = [1, 384], strides = [1, 1]} : vector<8x384xf32> to vector<1x384xf32>
    %32 = arith.truncf %30 : vector<1x128xf32> to vector<1x128xbf16>
    %cst_11 = arith.constant dense<0.000000e+00> : vector<1x384xf32>
    %33 = tpu.matmul %32, %9, %cst_11 {dimension_numbers = #tpu.dot_dimension_numbers<[1], [0], [0], [1], [0, 0, 1, 1], [], []>} : vector<1x128xbf16>, vector<128x384xbf16>, vector<1x384xf32> -> vector<1x384xf32>
    %34 = vector.extract_strided_slice %31 {offsets = [0, 0], sizes = [1, 128], strides = [1, 1]} : vector<1x384xf32> to vector<1x128xf32>
    %35 = vector.extract_strided_slice %33 {offsets = [0, 0], sizes = [1, 128], strides = [1, 1]} : vector<1x384xf32> to vector<1x128xf32>
    %36 = arith.addf %34, %35 : vector<1x128xf32>
    %37 = arith.negf %36 : vector<1x128xf32>
    %38 = math.exp %37 : vector<1x128xf32>
    %cst_12 = arith.constant 1.000000e+00 : f32
    %39 = vector.broadcast %cst_12 : f32 to vector<1x128xf32>
    %40 = arith.addf %39, %38 : vector<1x128xf32>
    %41 = arith.divf %39, %40 : vector<1x128xf32>
    %42 = vector.extract_strided_slice %31 {offsets = [0, 128], sizes = [1, 128], strides = [1, 1]} : vector<1x384xf32> to vector<1x128xf32>
    %43 = vector.extract_strided_slice %33 {offsets = [0, 128], sizes = [1, 128], strides = [1, 1]} : vector<1x384xf32> to vector<1x128xf32>
    %44 = arith.addf %42, %43 : vector<1x128xf32>
    %45 = arith.negf %44 : vector<1x128xf32>
    %46 = math.exp %45 : vector<1x128xf32>
    %cst_13 = arith.constant 1.000000e+00 : f32
    %47 = vector.broadcast %cst_13 : f32 to vector<1x128xf32>
    %48 = arith.addf %47, %46 : vector<1x128xf32>
    %49 = arith.divf %47, %48 : vector<1x128xf32>
    %50 = vector.extract_strided_slice %31 {offsets = [0, 256], sizes = [1, 128], strides = [1, 1]} : vector<1x384xf32> to vector<1x128xf32>
    %51 = vector.extract_strided_slice %33 {offsets = [0, 256], sizes = [1, 128], strides = [1, 1]} : vector<1x384xf32> to vector<1x128xf32>
    %52 = arith.addf %51, %10 : vector<1x128xf32>
    %53 = arith.mulf %41, %52 : vector<1x128xf32>
    %54 = arith.addf %50, %53 : vector<1x128xf32>
    %55 = math.tanh %54 : vector<1x128xf32>
    %cst_14 = arith.constant 1.000000e+00 : f32
    %56 = vector.broadcast %cst_14 : f32 to vector<1x128xf32>
    %57 = arith.subf %56, %49 : vector<1x128xf32>
    %58 = arith.mulf %57, %55 : vector<1x128xf32>
    %59 = arith.mulf %49, %30 : vector<1x128xf32>
    %60 = arith.addf %58, %59 : vector<1x128xf32>
    %61 = vector.extract_strided_slice %7 {offsets = [2, 0], sizes = [1, 384], strides = [1, 1]} : vector<8x384xf32> to vector<1x384xf32>
    %62 = arith.truncf %60 : vector<1x128xf32> to vector<1x128xbf16>
    %cst_15 = arith.constant dense<0.000000e+00> : vector<1x384xf32>
    %63 = tpu.matmul %62, %9, %cst_15 {dimension_numbers = #tpu.dot_dimension_numbers<[1], [0], [0], [1], [0, 0, 1, 1], [], []>} : vector<1x128xbf16>, vector<128x384xbf16>, vector<1x384xf32> -> vector<1x384xf32>
    %64 = vector.extract_strided_slice %61 {offsets = [0, 0], sizes = [1, 128], strides = [1, 1]} : vector<1x384xf32> to vector<1x128xf32>
    %65 = vector.extract_strided_slice %63 {offsets = [0, 0], sizes = [1, 128], strides = [1, 1]} : vector<1x384xf32> to vector<1x128xf32>
    %66 = arith.addf %64, %65 : vector<1x128xf32>
    %67 = arith.negf %66 : vector<1x128xf32>
    %68 = math.exp %67 : vector<1x128xf32>
    %cst_16 = arith.constant 1.000000e+00 : f32
    %69 = vector.broadcast %cst_16 : f32 to vector<1x128xf32>
    %70 = arith.addf %69, %68 : vector<1x128xf32>
    %71 = arith.divf %69, %70 : vector<1x128xf32>
    %72 = vector.extract_strided_slice %61 {offsets = [0, 128], sizes = [1, 128], strides = [1, 1]} : vector<1x384xf32> to vector<1x128xf32>
    %73 = vector.extract_strided_slice %63 {offsets = [0, 128], sizes = [1, 128], strides = [1, 1]} : vector<1x384xf32> to vector<1x128xf32>
    %74 = arith.addf %72, %73 : vector<1x128xf32>
    %75 = arith.negf %74 : vector<1x128xf32>
    %76 = math.exp %75 : vector<1x128xf32>
    %cst_17 = arith.constant 1.000000e+00 : f32
    %77 = vector.broadcast %cst_17 : f32 to vector<1x128xf32>
    %78 = arith.addf %77, %76 : vector<1x128xf32>
    %79 = arith.divf %77, %78 : vector<1x128xf32>
    %80 = vector.extract_strided_slice %61 {offsets = [0, 256], sizes = [1, 128], strides = [1, 1]} : vector<1x384xf32> to vector<1x128xf32>
    %81 = vector.extract_strided_slice %63 {offsets = [0, 256], sizes = [1, 128], strides = [1, 1]} : vector<1x384xf32> to vector<1x128xf32>
    %82 = arith.addf %81, %10 : vector<1x128xf32>
    %83 = arith.mulf %71, %82 : vector<1x128xf32>
    %84 = arith.addf %80, %83 : vector<1x128xf32>
    %85 = math.tanh %84 : vector<1x128xf32>
    %cst_18 = arith.constant 1.000000e+00 : f32
    %86 = vector.broadcast %cst_18 : f32 to vector<1x128xf32>
    %87 = arith.subf %86, %79 : vector<1x128xf32>
    %88 = arith.mulf %87, %85 : vector<1x128xf32>
    %89 = arith.mulf %79, %60 : vector<1x128xf32>
    %90 = arith.addf %88, %89 : vector<1x128xf32>
    %91 = vector.extract_strided_slice %7 {offsets = [3, 0], sizes = [1, 384], strides = [1, 1]} : vector<8x384xf32> to vector<1x384xf32>
    %92 = arith.truncf %90 : vector<1x128xf32> to vector<1x128xbf16>
    %cst_19 = arith.constant dense<0.000000e+00> : vector<1x384xf32>
    %93 = tpu.matmul %92, %9, %cst_19 {dimension_numbers = #tpu.dot_dimension_numbers<[1], [0], [0], [1], [0, 0, 1, 1], [], []>} : vector<1x128xbf16>, vector<128x384xbf16>, vector<1x384xf32> -> vector<1x384xf32>
    %94 = vector.extract_strided_slice %91 {offsets = [0, 0], sizes = [1, 128], strides = [1, 1]} : vector<1x384xf32> to vector<1x128xf32>
    %95 = vector.extract_strided_slice %93 {offsets = [0, 0], sizes = [1, 128], strides = [1, 1]} : vector<1x384xf32> to vector<1x128xf32>
    %96 = arith.addf %94, %95 : vector<1x128xf32>
    %97 = arith.negf %96 : vector<1x128xf32>
    %98 = math.exp %97 : vector<1x128xf32>
    %cst_20 = arith.constant 1.000000e+00 : f32
    %99 = vector.broadcast %cst_20 : f32 to vector<1x128xf32>
    %100 = arith.addf %99, %98 : vector<1x128xf32>
    %101 = arith.divf %99, %100 : vector<1x128xf32>
    %102 = vector.extract_strided_slice %91 {offsets = [0, 128], sizes = [1, 128], strides = [1, 1]} : vector<1x384xf32> to vector<1x128xf32>
    %103 = vector.extract_strided_slice %93 {offsets = [0, 128], sizes = [1, 128], strides = [1, 1]} : vector<1x384xf32> to vector<1x128xf32>
    %104 = arith.addf %102, %103 : vector<1x128xf32>
    %105 = arith.negf %104 : vector<1x128xf32>
    %106 = math.exp %105 : vector<1x128xf32>
    %cst_21 = arith.constant 1.000000e+00 : f32
    %107 = vector.broadcast %cst_21 : f32 to vector<1x128xf32>
    %108 = arith.addf %107, %106 : vector<1x128xf32>
    %109 = arith.divf %107, %108 : vector<1x128xf32>
    %110 = vector.extract_strided_slice %91 {offsets = [0, 256], sizes = [1, 128], strides = [1, 1]} : vector<1x384xf32> to vector<1x128xf32>
    %111 = vector.extract_strided_slice %93 {offsets = [0, 256], sizes = [1, 128], strides = [1, 1]} : vector<1x384xf32> to vector<1x128xf32>
    %112 = arith.addf %111, %10 : vector<1x128xf32>
    %113 = arith.mulf %101, %112 : vector<1x128xf32>
    %114 = arith.addf %110, %113 : vector<1x128xf32>
    %115 = math.tanh %114 : vector<1x128xf32>
    %cst_22 = arith.constant 1.000000e+00 : f32
    %116 = vector.broadcast %cst_22 : f32 to vector<1x128xf32>
    %117 = arith.subf %116, %109 : vector<1x128xf32>
    %118 = arith.mulf %117, %115 : vector<1x128xf32>
    %119 = arith.mulf %109, %90 : vector<1x128xf32>
    %120 = arith.addf %118, %119 : vector<1x128xf32>
    %121 = vector.extract_strided_slice %7 {offsets = [4, 0], sizes = [1, 384], strides = [1, 1]} : vector<8x384xf32> to vector<1x384xf32>
    %122 = arith.truncf %120 : vector<1x128xf32> to vector<1x128xbf16>
    %cst_23 = arith.constant dense<0.000000e+00> : vector<1x384xf32>
    %123 = tpu.matmul %122, %9, %cst_23 {dimension_numbers = #tpu.dot_dimension_numbers<[1], [0], [0], [1], [0, 0, 1, 1], [], []>} : vector<1x128xbf16>, vector<128x384xbf16>, vector<1x384xf32> -> vector<1x384xf32>
    %124 = vector.extract_strided_slice %121 {offsets = [0, 0], sizes = [1, 128], strides = [1, 1]} : vector<1x384xf32> to vector<1x128xf32>
    %125 = vector.extract_strided_slice %123 {offsets = [0, 0], sizes = [1, 128], strides = [1, 1]} : vector<1x384xf32> to vector<1x128xf32>
    %126 = arith.addf %124, %125 : vector<1x128xf32>
    %127 = arith.negf %126 : vector<1x128xf32>
    %128 = math.exp %127 : vector<1x128xf32>
    %cst_24 = arith.constant 1.000000e+00 : f32
    %129 = vector.broadcast %cst_24 : f32 to vector<1x128xf32>
    %130 = arith.addf %129, %128 : vector<1x128xf32>
    %131 = arith.divf %129, %130 : vector<1x128xf32>
    %132 = vector.extract_strided_slice %121 {offsets = [0, 128], sizes = [1, 128], strides = [1, 1]} : vector<1x384xf32> to vector<1x128xf32>
    %133 = vector.extract_strided_slice %123 {offsets = [0, 128], sizes = [1, 128], strides = [1, 1]} : vector<1x384xf32> to vector<1x128xf32>
    %134 = arith.addf %132, %133 : vector<1x128xf32>
    %135 = arith.negf %134 : vector<1x128xf32>
    %136 = math.exp %135 : vector<1x128xf32>
    %cst_25 = arith.constant 1.000000e+00 : f32
    %137 = vector.broadcast %cst_25 : f32 to vector<1x128xf32>
    %138 = arith.addf %137, %136 : vector<1x128xf32>
    %139 = arith.divf %137, %138 : vector<1x128xf32>
    %140 = vector.extract_strided_slice %121 {offsets = [0, 256], sizes = [1, 128], strides = [1, 1]} : vector<1x384xf32> to vector<1x128xf32>
    %141 = vector.extract_strided_slice %123 {offsets = [0, 256], sizes = [1, 128], strides = [1, 1]} : vector<1x384xf32> to vector<1x128xf32>
    %142 = arith.addf %141, %10 : vector<1x128xf32>
    %143 = arith.mulf %131, %142 : vector<1x128xf32>
    %144 = arith.addf %140, %143 : vector<1x128xf32>
    %145 = math.tanh %144 : vector<1x128xf32>
    %cst_26 = arith.constant 1.000000e+00 : f32
    %146 = vector.broadcast %cst_26 : f32 to vector<1x128xf32>
    %147 = arith.subf %146, %139 : vector<1x128xf32>
    %148 = arith.mulf %147, %145 : vector<1x128xf32>
    %149 = arith.mulf %139, %120 : vector<1x128xf32>
    %150 = arith.addf %148, %149 : vector<1x128xf32>
    %151 = vector.extract_strided_slice %7 {offsets = [5, 0], sizes = [1, 384], strides = [1, 1]} : vector<8x384xf32> to vector<1x384xf32>
    %152 = arith.truncf %150 : vector<1x128xf32> to vector<1x128xbf16>
    %cst_27 = arith.constant dense<0.000000e+00> : vector<1x384xf32>
    %153 = tpu.matmul %152, %9, %cst_27 {dimension_numbers = #tpu.dot_dimension_numbers<[1], [0], [0], [1], [0, 0, 1, 1], [], []>} : vector<1x128xbf16>, vector<128x384xbf16>, vector<1x384xf32> -> vector<1x384xf32>
    %154 = vector.extract_strided_slice %151 {offsets = [0, 0], sizes = [1, 128], strides = [1, 1]} : vector<1x384xf32> to vector<1x128xf32>
    %155 = vector.extract_strided_slice %153 {offsets = [0, 0], sizes = [1, 128], strides = [1, 1]} : vector<1x384xf32> to vector<1x128xf32>
    %156 = arith.addf %154, %155 : vector<1x128xf32>
    %157 = arith.negf %156 : vector<1x128xf32>
    %158 = math.exp %157 : vector<1x128xf32>
    %cst_28 = arith.constant 1.000000e+00 : f32
    %159 = vector.broadcast %cst_28 : f32 to vector<1x128xf32>
    %160 = arith.addf %159, %158 : vector<1x128xf32>
    %161 = arith.divf %159, %160 : vector<1x128xf32>
    %162 = vector.extract_strided_slice %151 {offsets = [0, 128], sizes = [1, 128], strides = [1, 1]} : vector<1x384xf32> to vector<1x128xf32>
    %163 = vector.extract_strided_slice %153 {offsets = [0, 128], sizes = [1, 128], strides = [1, 1]} : vector<1x384xf32> to vector<1x128xf32>
    %164 = arith.addf %162, %163 : vector<1x128xf32>
    %165 = arith.negf %164 : vector<1x128xf32>
    %166 = math.exp %165 : vector<1x128xf32>
    %cst_29 = arith.constant 1.000000e+00 : f32
    %167 = vector.broadcast %cst_29 : f32 to vector<1x128xf32>
    %168 = arith.addf %167, %166 : vector<1x128xf32>
    %169 = arith.divf %167, %168 : vector<1x128xf32>
    %170 = vector.extract_strided_slice %151 {offsets = [0, 256], sizes = [1, 128], strides = [1, 1]} : vector<1x384xf32> to vector<1x128xf32>
    %171 = vector.extract_strided_slice %153 {offsets = [0, 256], sizes = [1, 128], strides = [1, 1]} : vector<1x384xf32> to vector<1x128xf32>
    %172 = arith.addf %171, %10 : vector<1x128xf32>
    %173 = arith.mulf %161, %172 : vector<1x128xf32>
    %174 = arith.addf %170, %173 : vector<1x128xf32>
    %175 = math.tanh %174 : vector<1x128xf32>
    %cst_30 = arith.constant 1.000000e+00 : f32
    %176 = vector.broadcast %cst_30 : f32 to vector<1x128xf32>
    %177 = arith.subf %176, %169 : vector<1x128xf32>
    %178 = arith.mulf %177, %175 : vector<1x128xf32>
    %179 = arith.mulf %169, %150 : vector<1x128xf32>
    %180 = arith.addf %178, %179 : vector<1x128xf32>
    %181 = vector.extract_strided_slice %7 {offsets = [6, 0], sizes = [1, 384], strides = [1, 1]} : vector<8x384xf32> to vector<1x384xf32>
    %182 = arith.truncf %180 : vector<1x128xf32> to vector<1x128xbf16>
    %cst_31 = arith.constant dense<0.000000e+00> : vector<1x384xf32>
    %183 = tpu.matmul %182, %9, %cst_31 {dimension_numbers = #tpu.dot_dimension_numbers<[1], [0], [0], [1], [0, 0, 1, 1], [], []>} : vector<1x128xbf16>, vector<128x384xbf16>, vector<1x384xf32> -> vector<1x384xf32>
    %184 = vector.extract_strided_slice %181 {offsets = [0, 0], sizes = [1, 128], strides = [1, 1]} : vector<1x384xf32> to vector<1x128xf32>
    %185 = vector.extract_strided_slice %183 {offsets = [0, 0], sizes = [1, 128], strides = [1, 1]} : vector<1x384xf32> to vector<1x128xf32>
    %186 = arith.addf %184, %185 : vector<1x128xf32>
    %187 = arith.negf %186 : vector<1x128xf32>
    %188 = math.exp %187 : vector<1x128xf32>
    %cst_32 = arith.constant 1.000000e+00 : f32
    %189 = vector.broadcast %cst_32 : f32 to vector<1x128xf32>
    %190 = arith.addf %189, %188 : vector<1x128xf32>
    %191 = arith.divf %189, %190 : vector<1x128xf32>
    %192 = vector.extract_strided_slice %181 {offsets = [0, 128], sizes = [1, 128], strides = [1, 1]} : vector<1x384xf32> to vector<1x128xf32>
    %193 = vector.extract_strided_slice %183 {offsets = [0, 128], sizes = [1, 128], strides = [1, 1]} : vector<1x384xf32> to vector<1x128xf32>
    %194 = arith.addf %192, %193 : vector<1x128xf32>
    %195 = arith.negf %194 : vector<1x128xf32>
    %196 = math.exp %195 : vector<1x128xf32>
    %cst_33 = arith.constant 1.000000e+00 : f32
    %197 = vector.broadcast %cst_33 : f32 to vector<1x128xf32>
    %198 = arith.addf %197, %196 : vector<1x128xf32>
    %199 = arith.divf %197, %198 : vector<1x128xf32>
    %200 = vector.extract_strided_slice %181 {offsets = [0, 256], sizes = [1, 128], strides = [1, 1]} : vector<1x384xf32> to vector<1x128xf32>
    %201 = vector.extract_strided_slice %183 {offsets = [0, 256], sizes = [1, 128], strides = [1, 1]} : vector<1x384xf32> to vector<1x128xf32>
    %202 = arith.addf %201, %10 : vector<1x128xf32>
    %203 = arith.mulf %191, %202 : vector<1x128xf32>
    %204 = arith.addf %200, %203 : vector<1x128xf32>
    %205 = math.tanh %204 : vector<1x128xf32>
    %cst_34 = arith.constant 1.000000e+00 : f32
    %206 = vector.broadcast %cst_34 : f32 to vector<1x128xf32>
    %207 = arith.subf %206, %199 : vector<1x128xf32>
    %208 = arith.mulf %207, %205 : vector<1x128xf32>
    %209 = arith.mulf %199, %180 : vector<1x128xf32>
    %210 = arith.addf %208, %209 : vector<1x128xf32>
    %211 = vector.extract_strided_slice %7 {offsets = [7, 0], sizes = [1, 384], strides = [1, 1]} : vector<8x384xf32> to vector<1x384xf32>
    %212 = arith.truncf %210 : vector<1x128xf32> to vector<1x128xbf16>
    %cst_35 = arith.constant dense<0.000000e+00> : vector<1x384xf32>
    %213 = tpu.matmul %212, %9, %cst_35 {dimension_numbers = #tpu.dot_dimension_numbers<[1], [0], [0], [1], [0, 0, 1, 1], [], []>} : vector<1x128xbf16>, vector<128x384xbf16>, vector<1x384xf32> -> vector<1x384xf32>
    %214 = vector.extract_strided_slice %211 {offsets = [0, 0], sizes = [1, 128], strides = [1, 1]} : vector<1x384xf32> to vector<1x128xf32>
    %215 = vector.extract_strided_slice %213 {offsets = [0, 0], sizes = [1, 128], strides = [1, 1]} : vector<1x384xf32> to vector<1x128xf32>
    %216 = arith.addf %214, %215 : vector<1x128xf32>
    %217 = arith.negf %216 : vector<1x128xf32>
    %218 = math.exp %217 : vector<1x128xf32>
    %cst_36 = arith.constant 1.000000e+00 : f32
    %219 = vector.broadcast %cst_36 : f32 to vector<1x128xf32>
    %220 = arith.addf %219, %218 : vector<1x128xf32>
    %221 = arith.divf %219, %220 : vector<1x128xf32>
    %222 = vector.extract_strided_slice %211 {offsets = [0, 128], sizes = [1, 128], strides = [1, 1]} : vector<1x384xf32> to vector<1x128xf32>
    %223 = vector.extract_strided_slice %213 {offsets = [0, 128], sizes = [1, 128], strides = [1, 1]} : vector<1x384xf32> to vector<1x128xf32>
    %224 = arith.addf %222, %223 : vector<1x128xf32>
    %225 = arith.negf %224 : vector<1x128xf32>
    %226 = math.exp %225 : vector<1x128xf32>
    %cst_37 = arith.constant 1.000000e+00 : f32
    %227 = vector.broadcast %cst_37 : f32 to vector<1x128xf32>
    %228 = arith.addf %227, %226 : vector<1x128xf32>
    %229 = arith.divf %227, %228 : vector<1x128xf32>
    %230 = vector.extract_strided_slice %211 {offsets = [0, 256], sizes = [1, 128], strides = [1, 1]} : vector<1x384xf32> to vector<1x128xf32>
    %231 = vector.extract_strided_slice %213 {offsets = [0, 256], sizes = [1, 128], strides = [1, 1]} : vector<1x384xf32> to vector<1x128xf32>
    %232 = arith.addf %231, %10 : vector<1x128xf32>
    %233 = arith.mulf %221, %232 : vector<1x128xf32>
    %234 = arith.addf %230, %233 : vector<1x128xf32>
    %235 = math.tanh %234 : vector<1x128xf32>
    %cst_38 = arith.constant 1.000000e+00 : f32
    %236 = vector.broadcast %cst_38 : f32 to vector<1x128xf32>
    %237 = arith.subf %236, %229 : vector<1x128xf32>
    %238 = arith.mulf %237, %235 : vector<1x128xf32>
    %239 = arith.mulf %229, %210 : vector<1x128xf32>
    %240 = arith.addf %238, %239 : vector<1x128xf32>
    %c0_39 = arith.constant 0 : index
    %c0_40 = arith.constant 0 : index
    %241 = vector.load %arg5[%c0_39, %c0_40] : memref<1x128xf32, #tpu.memory_space<vmem>>, vector<1x128xf32>
    %242 = arith.mulf %240, %241 : vector<1x128xf32>
    %cst_41 = arith.constant dense<0.000000e+00> : vector<1xf32>
    %243 = vector.multi_reduction <add>, %242, %cst_41 [1] : vector<1x128xf32> to vector<1xf32>
    %244 = vector.shape_cast %243 : vector<1xf32> to vector<1x1xf32>
    %c0_42 = arith.constant 0 : index
    %c0_43 = arith.constant 0 : index
    %245 = vector.load %arg6[%c0_42, %c0_43] : memref<1x1xf32, #tpu.memory_space<vmem>>, vector<1x1xf32>
    %246 = arith.addf %244, %245 : vector<1x1xf32>
    %c0_44 = arith.constant 0 : index
    %c0_45 = arith.constant 0 : index
    %247 = vector.load %arg7[%c0_44, %c0_45] : memref<1x1xf32, #tpu.memory_space<vmem>>, vector<1x1xf32>
    tpu.vector_store %arg7[%c0_44, %c0_45], %246 {strides = array<i32>} : memref<1x1xf32, #tpu.memory_space<vmem>>, vector<1x1xf32>,
    return
  }
}

</mosaic_0001>

<llo_original>
// kernel: tpu_custom_call.1
$region0: #{tpu_custom_call.1}
  #allocation0 [shape = 'u32[]', space=smem, size = 0x4, offset = 0x4, fixed_abs, tag = 'smem constant byte address 0x4 - core index']
  #allocation1 [shape = 'u32[144,128]{1,0:T(1,128)}', space=vmem, size = 0x12000, scoped, tag = 'internal scratch']
  #allocation2 [shape = 'f32[1,1]{1,0:T(1,128)S(1)}', space=vmem, size = 0x200, scoped, tag = 'scoped memory for tpu_custom_call.1']
  %s0 = inlined_call_operand.vmem [shape: f32[8,1], index: 0, kind: input, shape index: {}]
  %s1 = inlined_call_operand.vmem [shape: f32[1,384], index: 1, kind: input, shape index: {}]
  %s2 = inlined_call_operand.vmem [shape: f32[1,384], index: 2, kind: input, shape index: {}]
  %s3 = inlined_call_operand.hbm [shape: f32[128,384], index: 3, kind: input, shape index: {}]
  %s4 = inlined_call_operand.vmem [shape: f32[1,128], index: 4, kind: input, shape index: {}]
  %s5 = inlined_call_operand.vmem [shape: f32[1,128], index: 5, kind: input, shape index: {}]
  %s6 = inlined_call_operand.<no memory space> [shape: f32[1,1], index: 6, kind: input, shape index: {}]
  %s7 = inlined_call_operand.hbm [shape: f32[1,1], index: 7, kind: output, shape index: {}]
  %s8 = sld [smem:[#allocation0]]
  $region42: #{tpu_custom_call.1} parent=0
    _
  %s10 = ssub.s32 1, %s8
  %s11 = scalar_select 0, %s10, %s8
  %v12 = vstv %s6
  %13 = vst [vmem:[#allocation2] sm:$0x1] %v12
  $region1: #{tpu_custom_call.1} parent=0
    #allocation3 [shape = 'u8[196608]{0}', space=vmem, size = 0x30000, scoped, tag = 'input window, operand 3, single buffered']
    #allocation4 [shape = 's32[1]{0}', space=sflag, size = 0x4, scoped, tag = 'scoped memory for tpu_custom_call.1']
    #allocation5 [shape = 's32[1]{0}', space=sflag, size = 0x4, scoped, tag = 'scoped memory for tpu_custom_call.1']
    #allocation6 [shape = 'u8[512]{0}', space=vmem, size = 0x400, scoped, tag = 'output window, operand 0, single buffered']
    %14 = vsyncpa [#allocation4], 0
    %15 = vsyncpa [#allocation5], 0
    // Predicated region
    $region2: #{tpu_custom_call.1} parent=1 // pred_check
      _
    $region3: #{tpu_custom_call.1} parent=1 // pred_check_branch
      %17 = sbr.rel (0) target = $region5
    $region4: #{tpu_custom_call.1} parent=1 // pred_region
      _
    $region5: #{tpu_custom_call.1} parent=1 // pred_fallthru
      _
    // Predicated region
    $region6: #{tpu_custom_call.1} parent=1 // pred_check
      _
    $region7: #{tpu_custom_call.1} parent=1 // pred_check_branch
      %19 = sbr.rel (0) target = $region9
    $region8: #{tpu_custom_call.1} parent=1 // pred_region
      _
    $region9: #{tpu_custom_call.1} parent=1 // pred_fallthru
      _
    // Predicated region
    $region10: #{tpu_custom_call.1} parent=1 // pred_check
      _
    $region11: #{tpu_custom_call.1} parent=1 // pred_check_branch
      %21 = sbr.rel (0) target = $region13
    $region12: #{tpu_custom_call.1} parent=1 // pred_region
      _
    $region13: #{tpu_custom_call.1} parent=1 // pred_fallthru
      _
    // Predicated region
    $region14: #{tpu_custom_call.1} parent=1 // pred_check
      _
    $region15: #{tpu_custom_call.1} parent=1 // pred_check_branch
      %23 = sbr.rel (0) target = $region17
    $region16: #{tpu_custom_call.1} parent=1 // pred_region
      %s25 = ssub.s32 6144, 6144
      %26 = vsyncadd [#allocation4], %s25
      %s27 = sshll.u32 [#allocation3], 4
      %s28 = int_to_ptr.vmem [resolvable:$true] %s27
      %33 = dma.hbm_to_vmem [thread:$0]  %s3, 6144, %s28, [#allocation4], 384, 384, 24
    $region17: #{tpu_custom_call.1} parent=1 // pred_fallthru
      _
    // Predicated region
    $region18: #{tpu_custom_call.1} parent=1 // pred_check
      _
    $region19: #{tpu_custom_call.1} parent=1 // pred_check_branch
      %35 = sbr.rel (0) target = $region21
    $region20: #{tpu_custom_call.1} parent=1 // pred_region
      _
    $region21: #{tpu_custom_call.1} parent=1 // pred_fallthru
      _
    // Predicated region
    $region22: #{tpu_custom_call.1} parent=1 // pred_check
      _
    $region23: #{tpu_custom_call.1} parent=1 // pred_check_branch
      %37 = sbr.rel (0) target = $region25
    $region24: #{tpu_custom_call.1} parent=1 // pred_region
      _
    $region25: #{tpu_custom_call.1} parent=1 // pred_fallthru
      _
    // Predicated region
    $region26: #{tpu_custom_call.1} parent=1 // pred_check
      _
    $region27: #{tpu_custom_call.1} parent=1 // pred_check_branch
      %39 = sbr.rel (0) target = $region29
    $region28: #{tpu_custom_call.1} parent=1 // pred_region
      _
    $region29: #{tpu_custom_call.1} parent=1 // pred_fallthru
      _
    // Predicated region
    $region30: #{tpu_custom_call.1} parent=1 // pred_check
      _
    $region31: #{tpu_custom_call.1} parent=1 // pred_check_branch
      %41 = sbr.rel (0) target = $region33
    $region32: #{tpu_custom_call.1} parent=1 // pred_region
      %42 = dma.done [#allocation4], 6144
    $region33: #{tpu_custom_call.1} parent=1 // pred_fallthru
      _
    %v44 = vld [vmem:[%s0] sm:$0xff]
    %v45 = vld [vmem:[%s1] sm:$0x7]
    %47 = vset.pattern.permute.xlu0 0
    %48 = vperm.xlu0 %47, %v44
    %v49 = vpop.permute.xlu0 %48
    %v52 = vlaneseq
    %v53 = vshrl.u32 %v52, 7
    %v54 = vsub.s32 0, %v53
    %v55 = vrot.slane %v45, %v54
    %v56 = vlaneseq
    %v57 = vshrl.u32 %v56, 7
    %v58 = vsub.s32 1, %v57
    %v59 = vrot.slane %v45, %v58
    %v60 = vlaneseq
    %v61 = vshrl.u32 %v60, 7
    %v62 = vsub.s32 2, %v61
    %v63 = vrot.slane %v45, %v62
    %v67 = vmul.f32 %v49, %v55
    %v68 = vmul.f32 %v49, %v59
    %v69 = vmul.f32 %v49, %v63
    %v70 = vld [vmem:[%s2] sm:$0x7]
    %v72 = vlaneseq
    %v73 = vshrl.u32 %v72, 7
    %v74 = vsub.s32 0, %v73
    %v75 = vrot.slane %v70, %v74
    %v76 = vlaneseq
    %v77 = vshrl.u32 %v76, 7
    %v78 = vsub.s32 1, %v77
    %v79 = vrot.slane %v70, %v78
    %v80 = vlaneseq
    %v81 = vshrl.u32 %v80, 7
    %v82 = vsub.s32 2, %v81
    %v83 = vrot.slane %v70, %v82
    %v87 = vadd.f32 %v67, %v75
    %v88 = vadd.f32 %v68, %v79
    %v89 = vadd.f32 %v69, %v83
    %v90 = vld [vmem:[#allocation3] sm:$0xff]
    %v91 = vld [vmem:[#allocation3 + $0x8] sm:$0xff]
    %v92 = vld [vmem:[#allocation3 + $0x10] sm:$0xff]
    %v93 = vld [vmem:[#allocation3 + $0x18] sm:$0xff]
    %v94 = vld [vmem:[#allocation3 + $0x20] sm:$0xff]
    %v95 = vld [vmem:[#allocation3 + $0x28] sm:$0xff]
    %v96 = vld [vmem:[#allocation3 + $0x30] sm:$0xff]
    %v97 = vld [vmem:[#allocation3 + $0x38] sm:$0xff]
    %v98 = vld [vmem:[#allocation3 + $0x40] sm:$0xff]
    %v99 = vld [vmem:[#allocation3 + $0x48] sm:$0xff]
    %v100 = vld [vmem:[#allocation3 + $0x50] sm:$0xff]
    %v101 = vld [vmem:[#allocation3 + $0x58] sm:$0xff]
    %v102 = vld [vmem:[#allocation3 + $0x60] sm:$0xff]
    %v103 = vld [vmem:[#allocation3 + $0x68] sm:$0xff]
    %v104 = vld [vmem:[#allocation3 + $0x70] sm:$0xff]
    %v105 = vld [vmem:[#allocation3 + $0x78] sm:$0xff]
    %v106 = vld [vmem:[#allocation3 + $0x80] sm:$0xff]
    %v107 = vld [vmem:[#allocation3 + $0x88] sm:$0xff]
    %v108 = vld [vmem:[#allocation3 + $0x90] sm:$0xff]
    %v109 = vld [vmem:[#allocation3 + $0x98] sm:$0xff]
    %v110 = vld [vmem:[#allocation3 + $0xa0] sm:$0xff]
    %v111 = vld [vmem:[#allocation3 + $0xa8] sm:$0xff]
    %v112 = vld [vmem:[#allocation3 + $0xb0] sm:$0xff]
    %v113 = vld [vmem:[#allocation3 + $0xb8] sm:$0xff]
    %v114 = vld [vmem:[#allocation3 + $0xc0] sm:$0xff]
    %v115 = vld [vmem:[#allocation3 + $0xc8] sm:$0xff]
    %v116 = vld [vmem:[#allocation3 + $0xd0] sm:$0xff]
    %v117 = vld [vmem:[#allocation3 + $0xd8] sm:$0xff]
    %v118 = vld [vmem:[#allocation3 + $0xe0] sm:$0xff]
    %v119 = vld [vmem:[#allocation3 + $0xe8] sm:$0xff]
    %v120 = vld [vmem:[#allocation3 + $0xf0] sm:$0xff]
    %v121 = vld [vmem:[#allocation3 + $0xf8] sm:$0xff]
    %v122 = vld [vmem:[#allocation3 + $0x100] sm:$0xff]
    %v123 = vld [vmem:[#allocation3 + $0x108] sm:$0xff]
    %v124 = vld [vmem:[#allocation3 + $0x110] sm:$0xff]
    %v125 = vld [vmem:[#allocation3 + $0x118] sm:$0xff]
    %v126 = vld [vmem:[#allocation3 + $0x120] sm:$0xff]
    %v127 = vld [vmem:[#allocation3 + $0x128] sm:$0xff]
    %v128 = vld [vmem:[#allocation3 + $0x130] sm:$0xff]
    %v129 = vld [vmem:[#allocation3 + $0x138] sm:$0xff]
    %v130 = vld [vmem:[#allocation3 + $0x140] sm:$0xff]
    %v131 = vld [vmem:[#allocation3 + $0x148] sm:$0xff]
    %v132 = vld [vmem:[#allocation3 + $0x150] sm:$0xff]
    %v133 = vld [vmem:[#allocation3 + $0x158] sm:$0xff]
    %v134 = vld [vmem:[#allocation3 + $0x160] sm:$0xff]
    %v135 = vld [vmem:[#allocation3 + $0x168] sm:$0xff]
    %v136 = vld [vmem:[#allocation3 + $0x170] sm:$0xff]
    %v137 = vld [vmem:[#allocation3 + $0x178] sm:$0xff]
    %v138 = vpack.c.bf16 %v93, %v90
    %v139 = vpack.c.bf16 %v94, %v91
    %v140 = vpack.c.bf16 %v95, %v92
    %v141 = vpack.c.bf16 %v99, %v96
    %v142 = vpack.c.bf16 %v100, %v97
    %v143 = vpack.c.bf16 %v101, %v98
    %v144 = vpack.c.bf16 %v105, %v102
    %v145 = vpack.c.bf16 %v106, %v103
    %v146 = vpack.c.bf16 %v107, %v104
    %v147 = vpack.c.bf16 %v111, %v108
    %v148 = vpack.c.bf16 %v112, %v109
    %v149 = vpack.c.bf16 %v113, %v110
    %v150 = vpack.c.bf16 %v117, %v114
    %v151 = vpack.c.bf16 %v118, %v115
    %v152 = vpack.c.bf16 %v119, %v116
    %v153 = vpack.c.bf16 %v123, %v120
    %v154 = vpack.c.bf16 %v124, %v121
    %v155 = vpack.c.bf16 %v125, %v122
    %v156 = vpack.c.bf16 %v129, %v126
    %v157 = vpack.c.bf16 %v130, %v127
    %v158 = vpack.c.bf16 %v131, %v128
    %v159 = vpack.c.bf16 %v135, %v132
    %v160 = vpack.c.bf16 %v136, %v133
    %v161 = vpack.c.bf16 %v137, %v134
    %v162 = vld [vmem:[%s4] sm:$0x1]
    %v163 = vxor.u32 %v87, 2147483648
    %v164 = vmul.f32 %v163, 1.442695
    %v165 = vpow.pop %v164
    %v166 = vadd.f32 %v165, 1.0
    %v167 = vrcp.pop %v166
    %v168 = vmul.f32 1.0, %v167
    %v169 = vxor.u32 %v88, 2147483648
    %v170 = vmul.f32 %v169, 1.442695
    %v171 = vpow.pop %v170
    %v172 = vadd.f32 %v171, 1.0
    %v173 = vrcp.pop %v172
    %v174 = vmul.f32 1.0, %v173
    %v175 = vmul.f32 %v168, %v162
    %v176 = vadd.f32 %v89, %v175
    %v177 = vtanh.pop %v176
    %v178 = vsub.f32 1.0, %v174
    %v179 = vmul.f32 %v178, %v177
    %v180 = vpack.c.bf16 %v179, %v179
    %181 = vmatprep.subr.bf16.mxu0 %v160
    %182 = vmatpush1.bf16.msra.mxu0 %v159
    %183 = vmatprep.subr.bf16.mxu0 %v157
    %184 = vmatpush1.bf16.msra.mxu0 %v156
    %185 = vmatprep.subr.bf16.mxu0 %v154
    %186 = vmatpush1.bf16.msra.mxu0 %v153
    %187 = vmatprep.subr.bf16.mxu0 %v151
    %188 = vmatpush1.bf16.msra.mxu0 %v150
    %189 = vmatprep.subr.bf16.mxu0 %v148
    %190 = vmatpush1.bf16.msra.mxu0 %v147
    %191 = vmatprep.subr.bf16.mxu0 %v145
    %192 = vmatpush1.bf16.msra.mxu0 %v144
    %193 = vmatprep.subr.bf16.mxu0 %v142
    %194 = vmatpush1.bf16.msra.mxu0 %v141
    %195 = vmatprep.subr.bf16.mxu0 %v139
    %196 = vmatpush1.bf16.msra.mxu0 %v138
    %197 = vmatprep.subr.bf16.mxu0 0
    %198 = vmatpush2.bf16.msra.mxu0 0
    %199 = vmatprep.subr.bf16.mxu0 0
    %200 = vmatpush2.bf16.msra.mxu0 0
    %201 = vmatprep.subr.bf16.mxu0 0
    %202 = vmatpush2.bf16.msra.mxu0 0
    %203 = vmatprep.subr.bf16.mxu0 0
    %204 = vmatpush2.bf16.msra.mxu0 0
    %205 = vmatprep.subr.bf16.mxu0 0
    %206 = vmatpush2.bf16.msra.mxu0 0
    %207 = vmatprep.subr.bf16.mxu0 0
    %208 = vmatpush2.bf16.msra.mxu0 0
    %209 = vmatprep.subr.bf16.mxu0 0
    %210 = vmatpush2.bf16.msra.mxu0 0
    %211 = vmatprep.subr.bf16.mxu0 0
    %212 = vmatpush2.bf16.msra.mxu0 0
    %213 = vmatprep.mubr.bf16.mxu0 0
    %214 = vmatmul.mubr.bf16.gmra.mxu0 %v180
    %v215 = vpop.f32.mrf.mxu0
    %v216 = vadd.f32 0.0, %v215
    %v217 = vpop.f32.mrf.mxu0
    %v218 = vadd.f32 0.0, %v217
    %v219 = vpop.f32.mrf.mxu0
    %v220 = vpop.f32.mrf.mxu0
    %221 = vdwg.mxu0
    %222 = vmatprep.subr.bf16.mxu0 0
    %223 = vmatpush1.bf16.msra.mxu0 %v161
    %224 = vmatprep.subr.bf16.mxu0 0
    %225 = vmatpush1.bf16.msra.mxu0 %v158
    %226 = vmatprep.subr.bf16.mxu0 0
    %227 = vmatpush1.bf16.msra.mxu0 %v155
    %228 = vmatprep.subr.bf16.mxu0 0
    %229 = vmatpush1.bf16.msra.mxu0 %v152
    %230 = vmatprep.subr.bf16.mxu0 0
    %231 = vmatpush1.bf16.msra.mxu0 %v149
    %232 = vmatprep.subr.bf16.mxu0 0
    %233 = vmatpush1.bf16.msra.mxu0 %v146
    %234 = vmatprep.subr.bf16.mxu0 0
    %235 = vmatpush1.bf16.msra.mxu0 %v143
    %236 = vmatprep.subr.bf16.mxu0 0
    %237 = vmatpush1.bf16.msra.mxu0 %v140
    %238 = vmatprep.subr.bf16.mxu0 0
    %239 = vmatpush2.bf16.msra.mxu0 0
    %240 = vmatprep.subr.bf16.mxu0 0
    %241 = vmatpush2.bf16.msra.mxu0 0
    %242 = vmatprep.subr.bf16.mxu0 0
    %243 = vmatpush2.bf16.msra.mxu0 0
    %244 = vmatprep.subr.bf16.mxu0 0
    %245 = vmatpush2.bf16.msra.mxu0 0
    %246 = vmatprep.subr.bf16.mxu0 0
    %247 = vmatpush2.bf16.msra.mxu0 0
    %248 = vmatprep.subr.bf16.mxu0 0
    %249 = vmatpush2.bf16.msra.mxu0 0
    %250 = vmatprep.subr.bf16.mxu0 0
    %251 = vmatpush2.bf16.msra.mxu0 0
    %252 = vmatprep.subr.bf16.mxu0 0
    %253 = vmatpush2.bf16.msra.mxu0 0
    %254 = vmatprep.mubr.bf16.mxu0 0
    %255 = vmatmul.mubr.bf16.gmra.mxu0 %v180
    %v256 = vpop.f32.mrf.mxu0
    %v257 = vadd.f32 0.0, %v256
    %v258 = vpop.f32.mrf.mxu0
    %v259 = vpop.f32.mrf.mxu0
    %v260 = vpop.f32.mrf.mxu0
    %261 = vdwg.mxu0
    %v263 = vrot.slane %v216, 7
    %v265 = vadd.f32 %v87, %v263
    %v266 = vxor.u32 %v265, 2147483648
    %v267 = vmul.f32 %v266, 1.442695
    %v268 = vpow.pop %v267
    %v269 = vadd.f32 %v268, 1.0
    %v270 = vrcp.pop %v269
    %v271 = vmul.f32 1.0, %v270
    %v273 = vrot.slane %v218, 7
    %v275 = vadd.f32 %v88, %v273
    %v276 = vxor.u32 %v275, 2147483648
    %v277 = vmul.f32 %v276, 1.442695
    %v278 = vpow.pop %v277
    %v279 = vadd.f32 %v278, 1.0
    %v280 = vrcp.pop %v279
    %v281 = vmul.f32 1.0, %v280
    %v282 = vadd.f32 %v257, %v162
    %v284 = vrot.slane %v282, 7
    %v286 = vmul.f32 %v271, %v284
    %v287 = vadd.f32 %v89, %v286
    %v288 = vtanh.pop %v287
    %v289 = vsub.f32 1.0, %v281
    %v290 = vmul.f32 %v289, %v288
    %v292 = vrot.slane %v179, 7
    %v294 = vmul.f32 %v281, %v292
    %v295 = vadd.f32 %v290, %v294
    %v296 = vpack.c.bf16 %v295, %v295
    %v298 = vshrl.u32 %v296, 16
    %301 = vmatprep.subr.bf16.mxu0 %v160
    %302 = vmatpush1.bf16.msra.mxu0 %v159
    %303 = vmatprep.subr.bf16.mxu0 %v157
    %304 = vmatpush1.bf16.msra.mxu0 %v156
    %305 = vmatprep.subr.bf16.mxu0 %v154
    %306 = vmatpush1.bf16.msra.mxu0 %v153
    %307 = vmatprep.subr.bf16.mxu0 %v151
    %308 = vmatpush1.bf16.msra.mxu0 %v150
    %309 = vmatprep.subr.bf16.mxu0 %v148
    %310 = vmatpush1.bf16.msra.mxu0 %v147
    %311 = vmatprep.subr.bf16.mxu0 %v145
    %312 = vmatpush1.bf16.msra.mxu0 %v144
    %313 = vmatprep.subr.bf16.mxu0 %v142
    %314 = vmatpush1.bf16.msra.mxu0 %v141
    %315 = vmatprep.subr.bf16.mxu0 %v139
    %316 = vmatpush1.bf16.msra.mxu0 %v138
    %317 = vmatprep.subr.bf16.mxu0 0
    %318 = vmatpush2.bf16.msra.mxu0 0
    %319 = vmatprep.subr.bf16.mxu0 0
    %320 = vmatpush2.bf16.msra.mxu0 0
    %321 = vmatprep.subr.bf16.mxu0 0
    %322 = vmatpush2.bf16.msra.mxu0 0
    %323 = vmatprep.subr.bf16.mxu0 0
    %324 = vmatpush2.bf16.msra.mxu0 0
    %325 = vmatprep.subr.bf16.mxu0 0
    %326 = vmatpush2.bf16.msra.mxu0 0
    %327 = vmatprep.subr.bf16.mxu0 0
    %328 = vmatpush2.bf16.msra.mxu0 0
    %329 = vmatprep.subr.bf16.mxu0 0
    %330 = vmatpush2.bf16.msra.mxu0 0
    %331 = vmatprep.subr.bf16.mxu0 0
    %332 = vmatpush2.bf16.msra.mxu0 0
    %333 = vmatprep.mubr.bf16.mxu0 0
    %334 = vmatmul.mubr.bf16.gmra.mxu0 %v298
    %v335 = vpop.f32.mrf.mxu0
    %v336 = vadd.f32 0.0, %v335
    %v337 = vpop.f32.mrf.mxu0
    %v338 = vadd.f32 0.0, %v337
    %v339 = vpop.f32.mrf.mxu0
    %v340 = vpop.f32.mrf.mxu0
    %341 = vdwg.mxu0
    %342 = vmatprep.subr.bf16.mxu0 0
    %343 = vmatpush1.bf16.msra.mxu0 %v161
    %344 = vmatprep.subr.bf16.mxu0 0
    %345 = vmatpush1.bf16.msra.mxu0 %v158
    %346 = vmatprep.subr.bf16.mxu0 0
    %347 = vmatpush1.bf16.msra.mxu0 %v155
    %348 = vmatprep.subr.bf16.mxu0 0
    %349 = vmatpush1.bf16.msra.mxu0 %v152
    %350 = vmatprep.subr.bf16.mxu0 0
    %351 = vmatpush1.bf16.msra.mxu0 %v149
    %352 = vmatprep.subr.bf16.mxu0 0
    %353 = vmatpush1.bf16.msra.mxu0 %v146
    %354 = vmatprep.subr.bf16.mxu0 0
    %355 = vmatpush1.bf16.msra.mxu0 %v143
    %356 = vmatprep.subr.bf16.mxu0 0
    %357 = vmatpush1.bf16.msra.mxu0 %v140
    %358 = vmatprep.subr.bf16.mxu0 0
    %359 = vmatpush2.bf16.msra.mxu0 0
    %360 = vmatprep.subr.bf16.mxu0 0
    %361 = vmatpush2.bf16.msra.mxu0 0
    %362 = vmatprep.subr.bf16.mxu0 0
    %363 = vmatpush2.bf16.msra.mxu0 0
    %364 = vmatprep.subr.bf16.mxu0 0
    %365 = vmatpush2.bf16.msra.mxu0 0
    %366 = vmatprep.subr.bf16.mxu0 0
    %367 = vmatpush2.bf16.msra.mxu0 0
    %368 = vmatprep.subr.bf16.mxu0 0
    %369 = vmatpush2.bf16.msra.mxu0 0
    %370 = vmatprep.subr.bf16.mxu0 0
    %371 = vmatpush2.bf16.msra.mxu0 0
    %372 = vmatprep.subr.bf16.mxu0 0
    %373 = vmatpush2.bf16.msra.mxu0 0
    %374 = vmatprep.mubr.bf16.mxu0 0
    %375 = vmatmul.mubr.bf16.gmra.mxu0 %v298
    %v376 = vpop.f32.mrf.mxu0
    %v377 = vadd.f32 0.0, %v376
    %v378 = vpop.f32.mrf.mxu0
    %v379 = vpop.f32.mrf.mxu0
    %v380 = vpop.f32.mrf.mxu0
    %381 = vdwg.mxu0
    %v383 = vrot.slane %v336, 6
    %v385 = vadd.f32 %v87, %v383
    %v386 = vxor.u32 %v385, 2147483648
    %v387 = vmul.f32 %v386, 1.442695
    %v388 = vpow.pop %v387
    %v389 = vadd.f32 %v388, 1.0
    %v390 = vrcp.pop %v389
    %v391 = vmul.f32 1.0, %v390
    %v393 = vrot.slane %v338, 6
    %v395 = vadd.f32 %v88, %v393
    %v396 = vxor.u32 %v395, 2147483648
    %v397 = vmul.f32 %v396, 1.442695
    %v398 = vpow.pop %v397
    %v399 = vadd.f32 %v398, 1.0
    %v400 = vrcp.pop %v399
    %v401 = vmul.f32 1.0, %v400
    %v402 = vadd.f32 %v377, %v162
    %v404 = vrot.slane %v402, 6
    %v406 = vmul.f32 %v391, %v404
    %v407 = vadd.f32 %v89, %v406
    %v408 = vtanh.pop %v407
    %v409 = vsub.f32 1.0, %v401
    %v410 = vmul.f32 %v409, %v408
    %v412 = vrot.slane %v295, 7
    %v414 = vmul.f32 %v401, %v412
    %v415 = vadd.f32 %v410, %v414
    %v416 = vpack.c.bf16 %v415, %v415
    %v418 = vrot.slane %v416, 1
    %420 = vmatprep.subr.bf16.mxu0 %v160
    %421 = vmatpush1.bf16.msra.mxu0 %v159
    %422 = vmatprep.subr.bf16.mxu0 %v157
    %423 = vmatpush1.bf16.msra.mxu0 %v156
    %424 = vmatprep.subr.bf16.mxu0 %v154
    %425 = vmatpush1.bf16.msra.mxu0 %v153
    %426 = vmatprep.subr.bf16.mxu0 %v151
    %427 = vmatpush1.bf16.msra.mxu0 %v150
    %428 = vmatprep.subr.bf16.mxu0 %v148
    %429 = vmatpush1.bf16.msra.mxu0 %v147
    %430 = vmatprep.subr.bf16.mxu0 %v145
    %431 = vmatpush1.bf16.msra.mxu0 %v144
    %432 = vmatprep.subr.bf16.mxu0 %v142
    %433 = vmatpush1.bf16.msra.mxu0 %v141
    %434 = vmatprep.subr.bf16.mxu0 %v139
    %435 = vmatpush1.bf16.msra.mxu0 %v138
    %436 = vmatprep.subr.bf16.mxu0 0
    %437 = vmatpush2.bf16.msra.mxu0 0
    %438 = vmatprep.subr.bf16.mxu0 0
    %439 = vmatpush2.bf16.msra.mxu0 0
    %440 = vmatprep.subr.bf16.mxu0 0
    %441 = vmatpush2.bf16.msra.mxu0 0
    %442 = vmatprep.subr.bf16.mxu0 0
    %443 = vmatpush2.bf16.msra.mxu0 0
    %444 = vmatprep.subr.bf16.mxu0 0
    %445 = vmatpush2.bf16.msra.mxu0 0
    %446 = vmatprep.subr.bf16.mxu0 0
    %447 = vmatpush2.bf16.msra.mxu0 0
    %448 = vmatprep.subr.bf16.mxu0 0
    %449 = vmatpush2.bf16.msra.mxu0 0
    %450 = vmatprep.subr.bf16.mxu0 0
    %451 = vmatpush2.bf16.msra.mxu0 0
    %452 = vmatprep.mubr.bf16.mxu0 0
    %453 = vmatmul.mubr.bf16.gmra.mxu0 %v418
    %v454 = vpop.f32.mrf.mxu0
    %v455 = vadd.f32 0.0, %v454
    %v456 = vpop.f32.mrf.mxu0
    %v457 = vadd.f32 0.0, %v456
    %v458 = vpop.f32.mrf.mxu0
    %v459 = vpop.f32.mrf.mxu0
    %460 = vdwg.mxu0
    %461 = vmatprep.subr.bf16.mxu0 0
    %462 = vmatpush1.bf16.msra.mxu0 %v161
    %463 = vmatprep.subr.bf16.mxu0 0
    %464 = vmatpush1.bf16.msra.mxu0 %v158
    %465 = vmatprep.subr.bf16.mxu0 0
    %466 = vmatpush1.bf16.msra.mxu0 %v155
    %467 = vmatprep.subr.bf16.mxu0 0
    %468 = vmatpush1.bf16.msra.mxu0 %v152
    %469 = vmatprep.subr.bf16.mxu0 0
    %470 = vmatpush1.bf16.msra.mxu0 %v149
    %471 = vmatprep.subr.bf16.mxu0 0
    %472 = vmatpush1.bf16.msra.mxu0 %v146
    %473 = vmatprep.subr.bf16.mxu0 0
    %474 = vmatpush1.bf16.msra.mxu0 %v143
    %475 = vmatprep.subr.bf16.mxu0 0
    %476 = vmatpush1.bf16.msra.mxu0 %v140
    %477 = vmatprep.subr.bf16.mxu0 0
    %478 = vmatpush2.bf16.msra.mxu0 0
    %479 = vmatprep.subr.bf16.mxu0 0
    %480 = vmatpush2.bf16.msra.mxu0 0
    %481 = vmatprep.subr.bf16.mxu0 0
    %482 = vmatpush2.bf16.msra.mxu0 0
    %483 = vmatprep.subr.bf16.mxu0 0
    %484 = vmatpush2.bf16.msra.mxu0 0
    %485 = vmatprep.subr.bf16.mxu0 0
    %486 = vmatpush2.bf16.msra.mxu0 0
    %487 = vmatprep.subr.bf16.mxu0 0
    %488 = vmatpush2.bf16.msra.mxu0 0
    %489 = vmatprep.subr.bf16.mxu0 0
    %490 = vmatpush2.bf16.msra.mxu0 0
    %491 = vmatprep.subr.bf16.mxu0 0
    %492 = vmatpush2.bf16.msra.mxu0 0
    %493 = vmatprep.mubr.bf16.mxu0 0
    %494 = vmatmul.mubr.bf16.gmra.mxu0 %v418
    %v495 = vpop.f32.mrf.mxu0
    %v496 = vadd.f32 0.0, %v495
    %v497 = vpop.f32.mrf.mxu0
    %v498 = vpop.f32.mrf.mxu0
    %v499 = vpop.f32.mrf.mxu0
    %500 = vdwg.mxu0
    %v502 = vrot.slane %v455, 5
    %v504 = vadd.f32 %v87, %v502
    %v505 = vxor.u32 %v504, 2147483648
    %v506 = vmul.f32 %v505, 1.442695
    %v507 = vpow.pop %v506
    %v508 = vadd.f32 %v507, 1.0
    %v509 = vrcp.pop %v508
    %v510 = vmul.f32 1.0, %v509
    %v512 = vrot.slane %v457, 5
    %v514 = vadd.f32 %v88, %v512
    %v515 = vxor.u32 %v514, 2147483648
    %v516 = vmul.f32 %v515, 1.442695
    %v517 = vpow.pop %v516
    %v518 = vadd.f32 %v517, 1.0
    %v519 = vrcp.pop %v518
    %v520 = vmul.f32 1.0, %v519
    %v521 = vadd.f32 %v496, %v162
    %v523 = vrot.slane %v521, 5
    %v525 = vmul.f32 %v510, %v523
    %v526 = vadd.f32 %v89, %v525
    %v527 = vtanh.pop %v526
    %v528 = vsub.f32 1.0, %v520
    %v529 = vmul.f32 %v528, %v527
    %v531 = vrot.slane %v415, 7
    %v533 = vmul.f32 %v520, %v531
    %v534 = vadd.f32 %v529, %v533
    %v535 = vpack.c.bf16 %v534, %v534
    %v537 = vshrl.u32 %v535, 16
    %v539 = vrot.slane %v537, 1
    %541 = vmatprep.subr.bf16.mxu0 %v160
    %542 = vmatpush1.bf16.msra.mxu0 %v159
    %543 = vmatprep.subr.bf16.mxu0 %v157
    %544 = vmatpush1.bf16.msra.mxu0 %v156
    %545 = vmatprep.subr.bf16.mxu0 %v154
    %546 = vmatpush1.bf16.msra.mxu0 %v153
    %547 = vmatprep.subr.bf16.mxu0 %v151
    %548 = vmatpush1.bf16.msra.mxu0 %v150
    %549 = vmatprep.subr.bf16.mxu0 %v148
    %550 = vmatpush1.bf16.msra.mxu0 %v147
    %551 = vmatprep.subr.bf16.mxu0 %v145
    %552 = vmatpush1.bf16.msra.mxu0 %v144
    %553 = vmatprep.subr.bf16.mxu0 %v142
    %554 = vmatpush1.bf16.msra.mxu0 %v141
    %555 = vmatprep.subr.bf16.mxu0 %v139
    %556 = vmatpush1.bf16.msra.mxu0 %v138
    %557 = vmatprep.subr.bf16.mxu0 0
    %558 = vmatpush2.bf16.msra.mxu0 0
    %559 = vmatprep.subr.bf16.mxu0 0
    %560 = vmatpush2.bf16.msra.mxu0 0
    %561 = vmatprep.subr.bf16.mxu0 0
    %562 = vmatpush2.bf16.msra.mxu0 0
    %563 = vmatprep.subr.bf16.mxu0 0
    %564 = vmatpush2.bf16.msra.mxu0 0
    %565 = vmatprep.subr.bf16.mxu0 0
    %566 = vmatpush2.bf16.msra.mxu0 0
    %567 = vmatprep.subr.bf16.mxu0 0
    %568 = vmatpush2.bf16.msra.mxu0 0
    %569 = vmatprep.subr.bf16.mxu0 0
    %570 = vmatpush2.bf16.msra.mxu0 0
    %571 = vmatprep.subr.bf16.mxu0 0
    %572 = vmatpush2.bf16.msra.mxu0 0
    %573 = vmatprep.mubr.bf16.mxu0 0
    %574 = vmatmul.mubr.bf16.gmra.mxu0 %v539
    %v575 = vpop.f32.mrf.mxu0
    %v576 = vadd.f32 0.0, %v575
    %v577 = vpop.f32.mrf.mxu0
    %v578 = vadd.f32 0.0, %v577
    %v579 = vpop.f32.mrf.mxu0
    %v580 = vpop.f32.mrf.mxu0
    %581 = vdwg.mxu0
    %582 = vmatprep.subr.bf16.mxu0 0
    %583 = vmatpush1.bf16.msra.mxu0 %v161
    %584 = vmatprep.subr.bf16.mxu0 0
    %585 = vmatpush1.bf16.msra.mxu0 %v158
    %586 = vmatprep.subr.bf16.mxu0 0
    %587 = vmatpush1.bf16.msra.mxu0 %v155
    %588 = vmatprep.subr.bf16.mxu0 0
    %589 = vmatpush1.bf16.msra.mxu0 %v152
    %590 = vmatprep.subr.bf16.mxu0 0
    %591 = vmatpush1.bf16.msra.mxu0 %v149
    %592 = vmatprep.subr.bf16.mxu0 0
    %593 = vmatpush1.bf16.msra.mxu0 %v146
    %594 = vmatprep.subr.bf16.mxu0 0
    %595 = vmatpush1.bf16.msra.mxu0 %v143
    %596 = vmatprep.subr.bf16.mxu0 0
    %597 = vmatpush1.bf16.msra.mxu0 %v140
    %598 = vmatprep.subr.bf16.mxu0 0
    %599 = vmatpush2.bf16.msra.mxu0 0
    %600 = vmatprep.subr.bf16.mxu0 0
    %601 = vmatpush2.bf16.msra.mxu0 0
    %602 = vmatprep.subr.bf16.mxu0 0
    %603 = vmatpush2.bf16.msra.mxu0 0
    %604 = vmatprep.subr.bf16.mxu0 0
    %605 = vmatpush2.bf16.msra.mxu0 0
    %606 = vmatprep.subr.bf16.mxu0 0
    %607 = vmatpush2.bf16.msra.mxu0 0
    %608 = vmatprep.subr.bf16.mxu0 0
    %609 = vmatpush2.bf16.msra.mxu0 0
    %610 = vmatprep.subr.bf16.mxu0 0
    %611 = vmatpush2.bf16.msra.mxu0 0
    %612 = vmatprep.subr.bf16.mxu0 0
    %613 = vmatpush2.bf16.msra.mxu0 0
    %614 = vmatprep.mubr.bf16.mxu0 0
    %615 = vmatmul.mubr.bf16.gmra.mxu0 %v539
    %v616 = vpop.f32.mrf.mxu0
    %v617 = vadd.f32 0.0, %v616
    %v618 = vpop.f32.mrf.mxu0
    %v619 = vpop.f32.mrf.mxu0
    %v620 = vpop.f32.mrf.mxu0
    %621 = vdwg.mxu0
    %v623 = vrot.slane %v576, 4
    %v625 = vadd.f32 %v87, %v623
    %v626 = vxor.u32 %v625, 2147483648
    %v627 = vmul.f32 %v626, 1.442695
    %v628 = vpow.pop %v627
    %v629 = vadd.f32 %v628, 1.0
    %v630 = vrcp.pop %v629
    %v631 = vmul.f32 1.0, %v630
    %v633 = vrot.slane %v578, 4
    %v635 = vadd.f32 %v88, %v633
    %v636 = vxor.u32 %v635, 2147483648
    %v637 = vmul.f32 %v636, 1.442695
    %v638 = vpow.pop %v637
    %v639 = vadd.f32 %v638, 1.0
    %v640 = vrcp.pop %v639
    %v641 = vmul.f32 1.0, %v640
    %v642 = vadd.f32 %v617, %v162
    %v644 = vrot.slane %v642, 4
    %v646 = vmul.f32 %v631, %v644
    %v647 = vadd.f32 %v89, %v646
    %v648 = vtanh.pop %v647
    %v649 = vsub.f32 1.0, %v641
    %v650 = vmul.f32 %v649, %v648
    %v652 = vrot.slane %v534, 7
    %v654 = vmul.f32 %v641, %v652
    %v655 = vadd.f32 %v650, %v654
    %v656 = vpack.c.bf16 %v655, %v655
    %v658 = vrot.slane %v656, 2
    %660 = vmatprep.subr.bf16.mxu0 %v160
    %661 = vmatpush1.bf16.msra.mxu0 %v159
    %662 = vmatprep.subr.bf16.mxu0 %v157
    %663 = vmatpush1.bf16.msra.mxu0 %v156
    %664 = vmatprep.subr.bf16.mxu0 %v154
    %665 = vmatpush1.bf16.msra.mxu0 %v153
    %666 = vmatprep.subr.bf16.mxu0 %v151
    %667 = vmatpush1.bf16.msra.mxu0 %v150
    %668 = vmatprep.subr.bf16.mxu0 %v148
    %669 = vmatpush1.bf16.msra.mxu0 %v147
    %670 = vmatprep.subr.bf16.mxu0 %v145
    %671 = vmatpush1.bf16.msra.mxu0 %v144
    %672 = vmatprep.subr.bf16.mxu0 %v142
    %673 = vmatpush1.bf16.msra.mxu0 %v141
    %674 = vmatprep.subr.bf16.mxu0 %v139
    %675 = vmatpush1.bf16.msra.mxu0 %v138
    %676 = vmatprep.subr.bf16.mxu0 0
    %677 = vmatpush2.bf16.msra.mxu0 0
    %678 = vmatprep.subr.bf16.mxu0 0
    %679 = vmatpush2.bf16.msra.mxu0 0
    %680 = vmatprep.subr.bf16.mxu0 0
    %681 = vmatpush2.bf16.msra.mxu0 0
    %682 = vmatprep.subr.bf16.mxu0 0
    %683 = vmatpush2.bf16.msra.mxu0 0
    %684 = vmatprep.subr.bf16.mxu0 0
    %685 = vmatpush2.bf16.msra.mxu0 0
    %686 = vmatprep.subr.bf16.mxu0 0
    %687 = vmatpush2.bf16.msra.mxu0 0
    %688 = vmatprep.subr.bf16.mxu0 0
    %689 = vmatpush2.bf16.msra.mxu0 0
    %690 = vmatprep.subr.bf16.mxu0 0
    %691 = vmatpush2.bf16.msra.mxu0 0
    %692 = vmatprep.mubr.bf16.mxu0 0
    %693 = vmatmul.mubr.bf16.gmra.mxu0 %v658
    %v694 = vpop.f32.mrf.mxu0
    %v695 = vadd.f32 0.0, %v694
    %v696 = vpop.f32.mrf.mxu0
    %v697 = vadd.f32 0.0, %v696
    %v698 = vpop.f32.mrf.mxu0
    %v699 = vpop.f32.mrf.mxu0
    %700 = vdwg.mxu0
    %701 = vmatprep.subr.bf16.mxu0 0
    %702 = vmatpush1.bf16.msra.mxu0 %v161
    %703 = vmatprep.subr.bf16.mxu0 0
    %704 = vmatpush1.bf16.msra.mxu0 %v158
    %705 = vmatprep.subr.bf16.mxu0 0
    %706 = vmatpush1.bf16.msra.mxu0 %v155
    %707 = vmatprep.subr.bf16.mxu0 0
    %708 = vmatpush1.bf16.msra.mxu0 %v152
    %709 = vmatprep.subr.bf16.mxu0 0
    %710 = vmatpush1.bf16.msra.mxu0 %v149
    %711 = vmatprep.subr.bf16.mxu0 0
    %712 = vmatpush1.bf16.msra.mxu0 %v146
    %713 = vmatprep.subr.bf16.mxu0 0
    %714 = vmatpush1.bf16.msra.mxu0 %v143
    %715 = vmatprep.subr.bf16.mxu0 0
    %716 = vmatpush1.bf16.msra.mxu0 %v140
    %717 = vmatprep.subr.bf16.mxu0 0
    %718 = vmatpush2.bf16.msra.mxu0 0
    %719 = vmatprep.subr.bf16.mxu0 0
    %720 = vmatpush2.bf16.msra.mxu0 0
    %721 = vmatprep.subr.bf16.mxu0 0
    %722 = vmatpush2.bf16.msra.mxu0 0
    %723 = vmatprep.subr.bf16.mxu0 0
    %724 = vmatpush2.bf16.msra.mxu0 0
    %725 = vmatprep.subr.bf16.mxu0 0
    %726 = vmatpush2.bf16.msra.mxu0 0
    %727 = vmatprep.subr.bf16.mxu0 0
    %728 = vmatpush2.bf16.msra.mxu0 0
    %729 = vmatprep.subr.bf16.mxu0 0
    %730 = vmatpush2.bf16.msra.mxu0 0
    %731 = vmatprep.subr.bf16.mxu0 0
    %732 = vmatpush2.bf16.msra.mxu0 0
    %733 = vmatprep.mubr.bf16.mxu0 0
    %734 = vmatmul.mubr.bf16.gmra.mxu0 %v658
    %v735 = vpop.f32.mrf.mxu0
    %v736 = vadd.f32 0.0, %v735
    %v737 = vpop.f32.mrf.mxu0
    %v738 = vpop.f32.mrf.mxu0
    %v739 = vpop.f32.mrf.mxu0
    %740 = vdwg.mxu0
    %v742 = vrot.slane %v695, 3
    %v744 = vadd.f32 %v87, %v742
    %v745 = vxor.u32 %v744, 2147483648
    %v746 = vmul.f32 %v745, 1.442695
    %v747 = vpow.pop %v746
    %v748 = vadd.f32 %v747, 1.0
    %v749 = vrcp.pop %v748
    %v750 = vmul.f32 1.0, %v749
    %v752 = vrot.slane %v697, 3
    %v754 = vadd.f32 %v88, %v752
    %v755 = vxor.u32 %v754, 2147483648
    %v756 = vmul.f32 %v755, 1.442695
    %v757 = vpow.pop %v756
    %v758 = vadd.f32 %v757, 1.0
    %v759 = vrcp.pop %v758
    %v760 = vmul.f32 1.0, %v759
    %v761 = vadd.f32 %v736, %v162
    %v763 = vrot.slane %v761, 3
    %v765 = vmul.f32 %v750, %v763
    %v766 = vadd.f32 %v89, %v765
    %v767 = vtanh.pop %v766
    %v768 = vsub.f32 1.0, %v760
    %v769 = vmul.f32 %v768, %v767
    %v771 = vrot.slane %v655, 7
    %v773 = vmul.f32 %v760, %v771
    %v774 = vadd.f32 %v769, %v773
    %v775 = vpack.c.bf16 %v774, %v774
    %v777 = vshrl.u32 %v775, 16
    %v779 = vrot.slane %v777, 2
    %781 = vmatprep.subr.bf16.mxu0 %v160
    %782 = vmatpush1.bf16.msra.mxu0 %v159
    %783 = vmatprep.subr.bf16.mxu0 %v157
    %784 = vmatpush1.bf16.msra.mxu0 %v156
    %785 = vmatprep.subr.bf16.mxu0 %v154
    %786 = vmatpush1.bf16.msra.mxu0 %v153
    %787 = vmatprep.subr.bf16.mxu0 %v151
    %788 = vmatpush1.bf16.msra.mxu0 %v150
    %789 = vmatprep.subr.bf16.mxu0 %v148
    %790 = vmatpush1.bf16.msra.mxu0 %v147
    %791 = vmatprep.subr.bf16.mxu0 %v145
    %792 = vmatpush1.bf16.msra.mxu0 %v144
    %793 = vmatprep.subr.bf16.mxu0 %v142
    %794 = vmatpush1.bf16.msra.mxu0 %v141
    %795 = vmatprep.subr.bf16.mxu0 %v139
    %796 = vmatpush1.bf16.msra.mxu0 %v138
    %797 = vmatprep.subr.bf16.mxu0 0
    %798 = vmatpush2.bf16.msra.mxu0 0
    %799 = vmatprep.subr.bf16.mxu0 0
    %800 = vmatpush2.bf16.msra.mxu0 0
    %801 = vmatprep.subr.bf16.mxu0 0
    %802 = vmatpush2.bf16.msra.mxu0 0
    %803 = vmatprep.subr.bf16.mxu0 0
    %804 = vmatpush2.bf16.msra.mxu0 0
    %805 = vmatprep.subr.bf16.mxu0 0
    %806 = vmatpush2.bf16.msra.mxu0 0
    %807 = vmatprep.subr.bf16.mxu0 0
    %808 = vmatpush2.bf16.msra.mxu0 0
    %809 = vmatprep.subr.bf16.mxu0 0
    %810 = vmatpush2.bf16.msra.mxu0 0
    %811 = vmatprep.subr.bf16.mxu0 0
    %812 = vmatpush2.bf16.msra.mxu0 0
    %813 = vmatprep.mubr.bf16.mxu0 0
    %814 = vmatmul.mubr.bf16.gmra.mxu0 %v779
    %v815 = vpop.f32.mrf.mxu0
    %v816 = vadd.f32 0.0, %v815
    %v817 = vpop.f32.mrf.mxu0
    %v818 = vadd.f32 0.0, %v817
    %v819 = vpop.f32.mrf.mxu0
    %v820 = vpop.f32.mrf.mxu0
    %821 = vdwg.mxu0
    %822 = vmatprep.subr.bf16.mxu0 0
    %823 = vmatpush1.bf16.msra.mxu0 %v161
    %824 = vmatprep.subr.bf16.mxu0 0
    %825 = vmatpush1.bf16.msra.mxu0 %v158
    %826 = vmatprep.subr.bf16.mxu0 0
    %827 = vmatpush1.bf16.msra.mxu0 %v155
    %828 = vmatprep.subr.bf16.mxu0 0
    %829 = vmatpush1.bf16.msra.mxu0 %v152
    %830 = vmatprep.subr.bf16.mxu0 0
    %831 = vmatpush1.bf16.msra.mxu0 %v149
    %832 = vmatprep.subr.bf16.mxu0 0
    %833 = vmatpush1.bf16.msra.mxu0 %v146
    %834 = vmatprep.subr.bf16.mxu0 0
    %835 = vmatpush1.bf16.msra.mxu0 %v143
    %836 = vmatprep.subr.bf16.mxu0 0
    %837 = vmatpush1.bf16.msra.mxu0 %v140
    %838 = vmatprep.subr.bf16.mxu0 0
    %839 = vmatpush2.bf16.msra.mxu0 0
    %840 = vmatprep.subr.bf16.mxu0 0
    %841 = vmatpush2.bf16.msra.mxu0 0
    %842 = vmatprep.subr.bf16.mxu0 0
    %843 = vmatpush2.bf16.msra.mxu0 0
    %844 = vmatprep.subr.bf16.mxu0 0
    %845 = vmatpush2.bf16.msra.mxu0 0
    %846 = vmatprep.subr.bf16.mxu0 0
    %847 = vmatpush2.bf16.msra.mxu0 0
    %848 = vmatprep.subr.bf16.mxu0 0
    %849 = vmatpush2.bf16.msra.mxu0 0
    %850 = vmatprep.subr.bf16.mxu0 0
    %851 = vmatpush2.bf16.msra.mxu0 0
    %852 = vmatprep.subr.bf16.mxu0 0
    %853 = vmatpush2.bf16.msra.mxu0 0
    %854 = vmatprep.mubr.bf16.mxu0 0
    %855 = vmatmul.mubr.bf16.gmra.mxu0 %v779
    %v856 = vpop.f32.mrf.mxu0
    %v857 = vadd.f32 0.0, %v856
    %v858 = vpop.f32.mrf.mxu0
    %v859 = vpop.f32.mrf.mxu0
    %v860 = vpop.f32.mrf.mxu0
    %861 = vdwg.mxu0
    %v863 = vrot.slane %v816, 2
    %v865 = vadd.f32 %v87, %v863
    %v866 = vxor.u32 %v865, 2147483648
    %v867 = vmul.f32 %v866, 1.442695
    %v868 = vpow.pop %v867
    %v869 = vadd.f32 %v868, 1.0
    %v870 = vrcp.pop %v869
    %v871 = vmul.f32 1.0, %v870
    %v873 = vrot.slane %v818, 2
    %v875 = vadd.f32 %v88, %v873
    %v876 = vxor.u32 %v875, 2147483648
    %v877 = vmul.f32 %v876, 1.442695
    %v878 = vpow.pop %v877
    %v879 = vadd.f32 %v878, 1.0
    %v880 = vrcp.pop %v879
    %v881 = vmul.f32 1.0, %v880
    %v882 = vadd.f32 %v857, %v162
    %v884 = vrot.slane %v882, 2
    %v886 = vmul.f32 %v871, %v884
    %v887 = vadd.f32 %v89, %v886
    %v888 = vtanh.pop %v887
    %v889 = vsub.f32 1.0, %v881
    %v890 = vmul.f32 %v889, %v888
    %v892 = vrot.slane %v774, 7
    %v894 = vmul.f32 %v881, %v892
    %v895 = vadd.f32 %v890, %v894
    %v896 = vpack.c.bf16 %v895, %v895
    %v898 = vrot.slane %v896, 3
    %900 = vmatprep.subr.bf16.mxu0 %v160
    %901 = vmatpush1.bf16.msra.mxu0 %v159
    %902 = vmatprep.subr.bf16.mxu0 %v157
    %903 = vmatpush1.bf16.msra.mxu0 %v156
    %904 = vmatprep.subr.bf16.mxu0 %v154
    %905 = vmatpush1.bf16.msra.mxu0 %v153
    %906 = vmatprep.subr.bf16.mxu0 %v151
    %907 = vmatpush1.bf16.msra.mxu0 %v150
    %908 = vmatprep.subr.bf16.mxu0 %v148
    %909 = vmatpush1.bf16.msra.mxu0 %v147
    %910 = vmatprep.subr.bf16.mxu0 %v145
    %911 = vmatpush1.bf16.msra.mxu0 %v144
    %912 = vmatprep.subr.bf16.mxu0 %v142
    %913 = vmatpush1.bf16.msra.mxu0 %v141
    %914 = vmatprep.subr.bf16.mxu0 %v139
    %915 = vmatpush1.bf16.msra.mxu0 %v138
    %916 = vmatprep.subr.bf16.mxu0 0
    %917 = vmatpush2.bf16.msra.mxu0 0
    %918 = vmatprep.subr.bf16.mxu0 0
    %919 = vmatpush2.bf16.msra.mxu0 0
    %920 = vmatprep.subr.bf16.mxu0 0
    %921 = vmatpush2.bf16.msra.mxu0 0
    %922 = vmatprep.subr.bf16.mxu0 0
    %923 = vmatpush2.bf16.msra.mxu0 0
    %924 = vmatprep.subr.bf16.mxu0 0
    %925 = vmatpush2.bf16.msra.mxu0 0
    %926 = vmatprep.subr.bf16.mxu0 0
    %927 = vmatpush2.bf16.msra.mxu0 0
    %928 = vmatprep.subr.bf16.mxu0 0
    %929 = vmatpush2.bf16.msra.mxu0 0
    %930 = vmatprep.subr.bf16.mxu0 0
    %931 = vmatpush2.bf16.msra.mxu0 0
    %932 = vmatprep.mubr.bf16.mxu0 0
    %933 = vmatmul.mubr.bf16.gmra.mxu0 %v898
    %v934 = vpop.f32.mrf.mxu0
    %v935 = vadd.f32 0.0, %v934
    %v936 = vpop.f32.mrf.mxu0
    %v937 = vadd.f32 0.0, %v936
    %v938 = vpop.f32.mrf.mxu0
    %v939 = vpop.f32.mrf.mxu0
    %940 = vdwg.mxu0
    %941 = vmatprep.subr.bf16.mxu0 0
    %942 = vmatpush1.bf16.msra.mxu0 %v161
    %943 = vmatprep.subr.bf16.mxu0 0
    %944 = vmatpush1.bf16.msra.mxu0 %v158
    %945 = vmatprep.subr.bf16.mxu0 0
    %946 = vmatpush1.bf16.msra.mxu0 %v155
    %947 = vmatprep.subr.bf16.mxu0 0
    %948 = vmatpush1.bf16.msra.mxu0 %v152
    %949 = vmatprep.subr.bf16.mxu0 0
    %950 = vmatpush1.bf16.msra.mxu0 %v149
    %951 = vmatprep.subr.bf16.mxu0 0
    %952 = vmatpush1.bf16.msra.mxu0 %v146
    %953 = vmatprep.subr.bf16.mxu0 0
    %954 = vmatpush1.bf16.msra.mxu0 %v143
    %955 = vmatprep.subr.bf16.mxu0 0
    %956 = vmatpush1.bf16.msra.mxu0 %v140
    %957 = vmatprep.subr.bf16.mxu0 0
    %958 = vmatpush2.bf16.msra.mxu0 0
    %959 = vmatprep.subr.bf16.mxu0 0
    %960 = vmatpush2.bf16.msra.mxu0 0
    %961 = vmatprep.subr.bf16.mxu0 0
    %962 = vmatpush2.bf16.msra.mxu0 0
    %963 = vmatprep.subr.bf16.mxu0 0
    %964 = vmatpush2.bf16.msra.mxu0 0
    %965 = vmatprep.subr.bf16.mxu0 0
    %966 = vmatpush2.bf16.msra.mxu0 0
    %967 = vmatprep.subr.bf16.mxu0 0
    %968 = vmatpush2.bf16.msra.mxu0 0
    %969 = vmatprep.subr.bf16.mxu0 0
    %970 = vmatpush2.bf16.msra.mxu0 0
    %971 = vmatprep.subr.bf16.mxu0 0
    %972 = vmatpush2.bf16.msra.mxu0 0
    %973 = vmatprep.mubr.bf16.mxu0 0
    %974 = vmatmul.mubr.bf16.gmra.mxu0 %v898
    %v975 = vpop.f32.mrf.mxu0
    %v976 = vadd.f32 0.0, %v975
    %v977 = vpop.f32.mrf.mxu0
    %v978 = vpop.f32.mrf.mxu0
    %v979 = vpop.f32.mrf.mxu0
    %980 = vdwg.mxu0
    %v982 = vrot.slane %v935, 1
    %v984 = vadd.f32 %v87, %v982
    %v985 = vxor.u32 %v984, 2147483648
    %v986 = vmul.f32 %v985, 1.442695
    %v987 = vpow.pop %v986
    %v988 = vadd.f32 %v987, 1.0
    %v989 = vrcp.pop %v988
    %v990 = vmul.f32 1.0, %v989
    %v992 = vrot.slane %v937, 1
    %v994 = vadd.f32 %v88, %v992
    %v995 = vxor.u32 %v994, 2147483648
    %v996 = vmul.f32 %v995, 1.442695
    %v997 = vpow.pop %v996
    %v998 = vadd.f32 %v997, 1.0
    %v999 = vrcp.pop %v998
    %v1000 = vmul.f32 1.0, %v999
    %v1001 = vadd.f32 %v976, %v162
    %v1003 = vrot.slane %v1001, 1
    %v1005 = vmul.f32 %v990, %v1003
    %v1006 = vadd.f32 %v89, %v1005
    %v1007 = vtanh.pop %v1006
    %v1008 = vsub.f32 1.0, %v1000
    %v1009 = vmul.f32 %v1008, %v1007
    %v1011 = vrot.slane %v895, 7
    %v1013 = vmul.f32 %v1000, %v1011
    %v1014 = vadd.f32 %v1009, %v1013
    %v1015 = vld [vmem:[%s5] sm:$0x1]
    %v1017 = vlaneseq
    %v1018 = vshrl.u32 %v1017, 7
    %v1019 = vsub.s32 0, %v1018
    %v1020 = vrot.slane %v1015, %v1019
    %v1022 = vmul.f32 %v1014, %v1020
    %vm1023 = vcmask 1047559
    %v1024 = vsel %vm1023, %v1022, 0.0
    %1025 = vadd.xlane.f32.xlu0 %v1024
    %v1026 = vpop.xlane.xlu0 %1025
    %v1027 = vld [vmem:[#allocation2] sm:$0x1]
    %v1029 = vlaneseq
    %v1030 = vshrl.u32 %v1029, 7
    %v1031 = vsub.s32 0, %v1030
    %v1032 = vrot.slane %v1027, %v1031
    %v1034 = vadd.f32 %v1026, %v1032
    %vm1035 = vcmask 7175
    %1036 = vst.msk [vmem:[#allocation6 - $0x7] sm:$0x80] %vm1035, %v1034
    // Predicated region
    $region34: #{tpu_custom_call.1} parent=1 // pred_check
      _
    $region35: #{tpu_custom_call.1} parent=1 // pred_check_branch
      %1038 = sbr.rel (0) target = $region37
    $region36: #{tpu_custom_call.1} parent=1 // pred_region
      %s1040 = ssub.s32 16, 16
      %1041 = vsyncadd [#allocation5], %s1040
      %s1043 = sshll.u32 [#allocation6], 4
      %s1044 = int_to_ptr.vmem [resolvable:$true] %s1043
      %1046 = dma.vmem_to_hbm [thread:$0]  %s1044, 16, %s7, [#allocation5]
    $region37: #{tpu_custom_call.1} parent=1 // pred_fallthru
      _
    // Predicated region
    $region38: #{tpu_custom_call.1} parent=1 // pred_check
      _
    $region39: #{tpu_custom_call.1} parent=1 // pred_check_branch
      %1048 = sbr.rel (0) target = $region41
    $region40: #{tpu_custom_call.1} parent=1 // pred_region
      %1049 = dma.done [#allocation5], 16
    $region41: #{tpu_custom_call.1} parent=1 // pred_fallthru
      _
    %1050 = vsyncpa [#allocation4], 1
    %1051 = vsyncpa [#allocation5], 1

</llo_original>
